<compile_context>
chip_gen: v7x
topology: tpu7x:2x2x1
jax: 0.10.0
libtpu: 0.0.40
codegen_flags: <defaults>
</compile_context>

<pallas_src>
import jax
import jax.numpy as jnp
from jax.experimental import pallas as pl
from jax.experimental.pallas import tpu as pltpu

FEATS = [7, 16, 32, 64, 128, 64, 32, 16, 1]
BN_EPS = 1e-5
PAD = 128
N_LAYERS = len(FEATS) - 1      # 8 linear layers
N_HIDDEN = N_LAYERS - 1        # 7 hidden layers with BN + ReLU


def mlp_kernel(x_ref, w_ref, vec_ref, b8_ref, o_ref, xpad_ref):
    """Fused 8-layer MLP (training-mode BatchNorm semantics).

    x_ref:    (B, 7)          f32   raw input (padded in-kernel)
    w_ref:    (8, 128, 128)   bf16  per-layer weights, (in, out), zero-padded
    vec_ref:  (16, 128)       f32   rows 0..6 = gamma_l, rows 8..14 = beta_l
    b8_ref:   (1,)            f32   fc8 bias (SMEM scalar)
    o_ref:    (B, 1)          f32
    xpad_ref: (B, 128)        f32   VMEM scratch used to lane-pad the input
    """
    B = x_ref.shape[0]
    fB = float(B)
    eps_b2 = BN_EPS * fB * fB           # compile-time constant

    # Zero-pad the (B, 7) input to (B, 128) inside the kernel.
    xpad_ref[...] = jnp.zeros_like(xpad_ref)
    xpad_ref[:, 0:FEATS[0]] = x_ref[...]
    h = xpad_ref[...].astype(jnp.bfloat16)                              # (B, 128)

    for l in range(N_HIDDEN):
        # Linear (hidden biases omitted: they cancel exactly inside
        # training-mode BatchNorm's (y - mean(y))).
        y = jnp.dot(h, w_ref[l], preferred_element_type=jnp.float32)    # (B, 128)

        # Batch statistics as raw sums; 1/B and 1/B^2 folded into the algebra:
        #   var + eps = (B*s2 - s1^2 + eps*B^2) / B^2
        #   scale = gamma * rsqrt(var+eps) = gamma * B * r
        #   shift = beta - mean*scale      = beta - s1 * gamma * r
        s1 = jnp.sum(y, axis=0, keepdims=True)                          # (1, 128)
        s2 = jnp.sum(y * y, axis=0, keepdims=True)                      # (1, 128)
        r = jax.lax.rsqrt(jnp.maximum(fB * s2 - s1 * s1, 0.0) + eps_b2)  # EUP
        gr = vec_ref[l:l + 1, :] * r                                    # gamma row
        scale = gr * fB
        shift = vec_ref[8 + l:9 + l, :] - s1 * gr                       # beta row
        h = jnp.maximum(y * scale + shift, 0.0).astype(jnp.bfloat16)    # ReLU

    # Final layer: Linear only (fc8); scalar bias added to column 0 only.
    y = jnp.dot(h, w_ref[N_LAYERS - 1], preferred_element_type=jnp.float32)
    o_ref[...] = y[:, 0:1] + b8_ref[0]


def init_packed_params(key):
    """PyTorch-default init, packed into pre-padded slabs.

    Linear W ~ U(-1/sqrt(fan_in), 1/sqrt(fan_in)), stored transposed (in, out),
    zero-padded to (128, 128) and cast to bf16.  Hidden-layer biases are not
    materialized (exact cancellation under training-mode BN).  BN gamma=1,
    beta=0.  fc8 bias ~ U(-bound, bound) returned as a (1,) scalar.
    """
    w_slab = jnp.zeros((N_LAYERS, PAD, PAD), jnp.float32)
    vec_slab = jnp.zeros((16, PAD), jnp.float32)
    b8 = jnp.zeros((1,), jnp.float32)
    for i in range(N_LAYERS):
        fan_in, fan_out = FEATS[i], FEATS[i + 1]
        key, kw, kb = jax.random.split(key, 3)
        bound = 1.0 / (fan_in ** 0.5)
        W = jax.random.uniform(kw, (fan_in, fan_out), jnp.float32, -bound, bound)
        w_slab = w_slab.at[i, :fan_in, :fan_out].set(W)
        if i < N_HIDDEN:
            vec_slab = vec_slab.at[i, :fan_out].set(1.0)   # gamma (beta row stays 0)
        else:
            b8 = jax.random.uniform(kb, (1,), jnp.float32, -bound, bound)
    return w_slab.astype(jnp.bfloat16), vec_slab, b8


@jax.jit
def regression_model_latency(x, w_slab, vec_slab, b8):
    B = x.shape[0]
    vmem = pl.BlockSpec(memory_space=pltpu.MemorySpace.VMEM)
    smem = pl.BlockSpec(memory_space=pltpu.MemorySpace.SMEM)
    return pl.pallas_call(
        mlp_kernel,
        out_shape=jax.ShapeDtypeStruct((B, 1), jnp.float32),
        in_specs=[vmem, vmem, vmem, smem],
        out_specs=vmem,
        scratch_shapes=[pltpu.VMEM((B, PAD), jnp.float32)],
    )(x, w_slab, vec_slab, b8)


if __name__ == "__main__":
    key = jax.random.PRNGKey(0)
    key, kx, kp = jax.random.split(key, 3)

    batch = 16
    x = jax.random.normal(kx, (batch, FEATS[0]), dtype=jnp.float32)
    w_slab, vec_slab, b8 = init_packed_params(kp)

    out = regression_model_latency(x, w_slab, vec_slab, b8)
    jax.block_until_ready(out)
    assert out.shape == (batch, 1), out.shape
    print("KERNEL_OK")
</pallas_src>

<mosaic_0001>
module attributes {stable_mosaic.version = 11 : i64} {
  func.func @mlp_kernel(%arg0: memref<16x7xf32, #tpu.memory_space<vmem>>, %arg1: memref<8x128x128xbf16, #tpu.memory_space<vmem>>, %arg2: memref<16x128xf32, #tpu.memory_space<vmem>>, %arg3: memref<1xf32, #tpu.memory_space<smem>>, %arg4: memref<16x1xf32, #tpu.memory_space<vmem>>, %arg5: memref<16x128xf32, #tpu.memory_space<vmem>>) attributes {dimension_semantics = [], scalar_prefetch = 0 : i64, scratch_operands = 1 : i64, tpu.core_type = #tpu.core_type<tc>} {
    %cst = arith.constant 0.000000e+00 : f32
    %0 = vector.broadcast %cst : f32 to vector<16x128xf32>
    %c0 = arith.constant 0 : index
    %c0_0 = arith.constant 0 : index
    %1 = vector.load %arg5[%c0, %c0_0] : memref<16x128xf32, #tpu.memory_space<vmem>>, vector<16x128xf32>
    tpu.vector_store %arg5[%c0, %c0_0], %0 {strides = array<i32>} : memref<16x128xf32, #tpu.memory_space<vmem>>, vector<16x128xf32>,
    %c0_1 = arith.constant 0 : index
    %c0_2 = arith.constant 0 : index
    %2 = vector.load %arg0[%c0_1, %c0_2] : memref<16x7xf32, #tpu.memory_space<vmem>>, vector<16x7xf32>
    %c0_3 = arith.constant 0 : index
    %c0_4 = arith.constant 0 : index
    %3 = vector.load %arg5[%c0_3, %c0_4] : memref<16x128xf32, #tpu.memory_space<vmem>>, vector<16x7xf32>
    tpu.vector_store %arg5[%c0_3, %c0_4], %2 {strides = array<i32>} : memref<16x128xf32, #tpu.memory_space<vmem>>, vector<16x7xf32>,
    %c0_5 = arith.constant 0 : index
    %c0_6 = arith.constant 0 : index
    %4 = vector.load %arg5[%c0_5, %c0_6] : memref<16x128xf32, #tpu.memory_space<vmem>>, vector<16x128xf32>
    %5 = arith.truncf %4 : vector<16x128xf32> to vector<16x128xbf16>
    %c0_7 = arith.constant 0 : index
    %c0_8 = arith.constant 0 : index
    %c0_9 = arith.constant 0 : index
    %6 = vector.load %arg1[%c0_7, %c0_8, %c0_9] : memref<8x128x128xbf16, #tpu.memory_space<vmem>>, vector<1x128x128xbf16>
    %7 = vector.shape_cast %6 : vector<1x128x128xbf16> to vector<128x128xbf16>
    %cst_10 = arith.constant dense<0.000000e+00> : vector<16x128xf32>
    %8 = tpu.matmul %5, %7, %cst_10 {dimension_numbers = #tpu.dot_dimension_numbers<[1], [0], [0], [1], [0, 0, 1, 1], [], []>} : vector<16x128xbf16>, vector<128x128xbf16>, vector<16x128xf32> -> vector<16x128xf32>
    %cst_11 = arith.constant dense<0.000000e+00> : vector<128xf32>
    %9 = vector.multi_reduction <add>, %8, %cst_11 [0] : vector<16x128xf32> to vector<128xf32>
    %10 = vector.shape_cast %9 : vector<128xf32> to vector<1x128xf32>
    %11 = arith.mulf %8, %8 : vector<16x128xf32>
    %cst_12 = arith.constant dense<0.000000e+00> : vector<128xf32>
    %12 = vector.multi_reduction <add>, %11, %cst_12 [0] : vector<16x128xf32> to vector<128xf32>
    %13 = vector.shape_cast %12 : vector<128xf32> to vector<1x128xf32>
    %cst_13 = arith.constant 1.600000e+01 : f32
    %14 = vector.broadcast %cst_13 : f32 to vector<1x128xf32>
    %15 = arith.mulf %14, %13 : vector<1x128xf32>
    %16 = arith.mulf %10, %10 : vector<1x128xf32>
    %17 = arith.subf %15, %16 : vector<1x128xf32>
    %cst_14 = arith.constant 0.000000e+00 : f32
    %18 = vector.broadcast %cst_14 : f32 to vector<1x128xf32>
    %19 = arith.maximumf %17, %18 : vector<1x128xf32>
    %cst_15 = arith.constant 2.560000e-03 : f32
    %20 = vector.broadcast %cst_15 : f32 to vector<1x128xf32>
    %21 = arith.addf %19, %20 : vector<1x128xf32>
    %22 = math.rsqrt %21 : vector<1x128xf32>
    %c0_16 = arith.constant 0 : index
    %c0_17 = arith.constant 0 : index
    %23 = vector.load %arg2[%c0_16, %c0_17] : memref<16x128xf32, #tpu.memory_space<vmem>>, vector<1x128xf32>
    %24 = arith.mulf %23, %22 : vector<1x128xf32>
    %cst_18 = arith.constant 1.600000e+01 : f32
    %25 = vector.broadcast %cst_18 : f32 to vector<1x128xf32>
    %26 = arith.mulf %24, %25 : vector<1x128xf32>
    %c8 = arith.constant 8 : index
    %c0_19 = arith.constant 0 : index
    %27 = vector.load %arg2[%c8, %c0_19] : memref<16x128xf32, #tpu.memory_space<vmem>>, vector<1x128xf32>
    %28 = arith.mulf %10, %24 : vector<1x128xf32>
    %29 = arith.subf %27, %28 : vector<1x128xf32>
    %30 = vector.broadcast %26 : vector<1x128xf32> to vector<16x128xf32>
    %31 = arith.mulf %8, %30 : vector<16x128xf32>
    %32 = vector.broadcast %29 : vector<1x128xf32> to vector<16x128xf32>
    %33 = arith.addf %31, %32 : vector<16x128xf32>
    %cst_20 = arith.constant 0.000000e+00 : f32
    %34 = vector.broadcast %cst_20 : f32 to vector<16x128xf32>
    %35 = arith.maximumf %33, %34 : vector<16x128xf32>
    %36 = arith.truncf %35 : vector<16x128xf32> to vector<16x128xbf16>
    %c1 = arith.constant 1 : index
    %c0_21 = arith.constant 0 : index
    %c0_22 = arith.constant 0 : index
    %37 = vector.load %arg1[%c1, %c0_21, %c0_22] : memref<8x128x128xbf16, #tpu.memory_space<vmem>>, vector<1x128x128xbf16>
    %38 = vector.shape_cast %37 : vector<1x128x128xbf16> to vector<128x128xbf16>
    %cst_23 = arith.constant dense<0.000000e+00> : vector<16x128xf32>
    %39 = tpu.matmul %36, %38, %cst_23 {dimension_numbers = #tpu.dot_dimension_numbers<[1], [0], [0], [1], [0, 0, 1, 1], [], []>} : vector<16x128xbf16>, vector<128x128xbf16>, vector<16x128xf32> -> vector<16x128xf32>
    %cst_24 = arith.constant dense<0.000000e+00> : vector<128xf32>
    %40 = vector.multi_reduction <add>, %39, %cst_24 [0] : vector<16x128xf32> to vector<128xf32>
    %41 = vector.shape_cast %40 : vector<128xf32> to vector<1x128xf32>
    %42 = arith.mulf %39, %39 : vector<16x128xf32>
    %cst_25 = arith.constant dense<0.000000e+00> : vector<128xf32>
    %43 = vector.multi_reduction <add>, %42, %cst_25 [0] : vector<16x128xf32> to vector<128xf32>
    %44 = vector.shape_cast %43 : vector<128xf32> to vector<1x128xf32>
    %cst_26 = arith.constant 1.600000e+01 : f32
    %45 = vector.broadcast %cst_26 : f32 to vector<1x128xf32>
    %46 = arith.mulf %45, %44 : vector<1x128xf32>
    %47 = arith.mulf %41, %41 : vector<1x128xf32>
    %48 = arith.subf %46, %47 : vector<1x128xf32>
    %cst_27 = arith.constant 0.000000e+00 : f32
    %49 = vector.broadcast %cst_27 : f32 to vector<1x128xf32>
    %50 = arith.maximumf %48, %49 : vector<1x128xf32>
    %cst_28 = arith.constant 2.560000e-03 : f32
    %51 = vector.broadcast %cst_28 : f32 to vector<1x128xf32>
    %52 = arith.addf %50, %51 : vector<1x128xf32>
    %53 = math.rsqrt %52 : vector<1x128xf32>
    %c1_29 = arith.constant 1 : index
    %c0_30 = arith.constant 0 : index
    %54 = vector.load %arg2[%c1_29, %c0_30] : memref<16x128xf32, #tpu.memory_space<vmem>>, vector<1x128xf32>
    %55 = arith.mulf %54, %53 : vector<1x128xf32>
    %cst_31 = arith.constant 1.600000e+01 : f32
    %56 = vector.broadcast %cst_31 : f32 to vector<1x128xf32>
    %57 = arith.mulf %55, %56 : vector<1x128xf32>
    %c9 = arith.constant 9 : index
    %c0_32 = arith.constant 0 : index
    %58 = vector.load %arg2[%c9, %c0_32] : memref<16x128xf32, #tpu.memory_space<vmem>>, vector<1x128xf32>
    %59 = arith.mulf %41, %55 : vector<1x128xf32>
    %60 = arith.subf %58, %59 : vector<1x128xf32>
    %61 = vector.broadcast %57 : vector<1x128xf32> to vector<16x128xf32>
    %62 = arith.mulf %39, %61 : vector<16x128xf32>
    %63 = vector.broadcast %60 : vector<1x128xf32> to vector<16x128xf32>
    %64 = arith.addf %62, %63 : vector<16x128xf32>
    %cst_33 = arith.constant 0.000000e+00 : f32
    %65 = vector.broadcast %cst_33 : f32 to vector<16x128xf32>
    %66 = arith.maximumf %64, %65 : vector<16x128xf32>
    %67 = arith.truncf %66 : vector<16x128xf32> to vector<16x128xbf16>
    %c2 = arith.constant 2 : index
    %c0_34 = arith.constant 0 : index
    %c0_35 = arith.constant 0 : index
    %68 = vector.load %arg1[%c2, %c0_34, %c0_35] : memref<8x128x128xbf16, #tpu.memory_space<vmem>>, vector<1x128x128xbf16>
    %69 = vector.shape_cast %68 : vector<1x128x128xbf16> to vector<128x128xbf16>
    %cst_36 = arith.constant dense<0.000000e+00> : vector<16x128xf32>
    %70 = tpu.matmul %67, %69, %cst_36 {dimension_numbers = #tpu.dot_dimension_numbers<[1], [0], [0], [1], [0, 0, 1, 1], [], []>} : vector<16x128xbf16>, vector<128x128xbf16>, vector<16x128xf32> -> vector<16x128xf32>
    %cst_37 = arith.constant dense<0.000000e+00> : vector<128xf32>
    %71 = vector.multi_reduction <add>, %70, %cst_37 [0] : vector<16x128xf32> to vector<128xf32>
    %72 = vector.shape_cast %71 : vector<128xf32> to vector<1x128xf32>
    %73 = arith.mulf %70, %70 : vector<16x128xf32>
    %cst_38 = arith.constant dense<0.000000e+00> : vector<128xf32>
    %74 = vector.multi_reduction <add>, %73, %cst_38 [0] : vector<16x128xf32> to vector<128xf32>
    %75 = vector.shape_cast %74 : vector<128xf32> to vector<1x128xf32>
    %cst_39 = arith.constant 1.600000e+01 : f32
    %76 = vector.broadcast %cst_39 : f32 to vector<1x128xf32>
    %77 = arith.mulf %76, %75 : vector<1x128xf32>
    %78 = arith.mulf %72, %72 : vector<1x128xf32>
    %79 = arith.subf %77, %78 : vector<1x128xf32>
    %cst_40 = arith.constant 0.000000e+00 : f32
    %80 = vector.broadcast %cst_40 : f32 to vector<1x128xf32>
    %81 = arith.maximumf %79, %80 : vector<1x128xf32>
    %cst_41 = arith.constant 2.560000e-03 : f32
    %82 = vector.broadcast %cst_41 : f32 to vector<1x128xf32>
    %83 = arith.addf %81, %82 : vector<1x128xf32>
    %84 = math.rsqrt %83 : vector<1x128xf32>
    %c2_42 = arith.constant 2 : index
    %c0_43 = arith.constant 0 : index
    %85 = vector.load %arg2[%c2_42, %c0_43] : memref<16x128xf32, #tpu.memory_space<vmem>>, vector<1x128xf32>
    %86 = arith.mulf %85, %84 : vector<1x128xf32>
    %cst_44 = arith.constant 1.600000e+01 : f32
    %87 = vector.broadcast %cst_44 : f32 to vector<1x128xf32>
    %88 = arith.mulf %86, %87 : vector<1x128xf32>
    %c10 = arith.constant 10 : index
    %c0_45 = arith.constant 0 : index
    %89 = vector.load %arg2[%c10, %c0_45] : memref<16x128xf32, #tpu.memory_space<vmem>>, vector<1x128xf32>
    %90 = arith.mulf %72, %86 : vector<1x128xf32>
    %91 = arith.subf %89, %90 : vector<1x128xf32>
    %92 = vector.broadcast %88 : vector<1x128xf32> to vector<16x128xf32>
    %93 = arith.mulf %70, %92 : vector<16x128xf32>
    %94 = vector.broadcast %91 : vector<1x128xf32> to vector<16x128xf32>
    %95 = arith.addf %93, %94 : vector<16x128xf32>
    %cst_46 = arith.constant 0.000000e+00 : f32
    %96 = vector.broadcast %cst_46 : f32 to vector<16x128xf32>
    %97 = arith.maximumf %95, %96 : vector<16x128xf32>
    %98 = arith.truncf %97 : vector<16x128xf32> to vector<16x128xbf16>
    %c3 = arith.constant 3 : index
    %c0_47 = arith.constant 0 : index
    %c0_48 = arith.constant 0 : index
    %99 = vector.load %arg1[%c3, %c0_47, %c0_48] : memref<8x128x128xbf16, #tpu.memory_space<vmem>>, vector<1x128x128xbf16>
    %100 = vector.shape_cast %99 : vector<1x128x128xbf16> to vector<128x128xbf16>
    %cst_49 = arith.constant dense<0.000000e+00> : vector<16x128xf32>
    %101 = tpu.matmul %98, %100, %cst_49 {dimension_numbers = #tpu.dot_dimension_numbers<[1], [0], [0], [1], [0, 0, 1, 1], [], []>} : vector<16x128xbf16>, vector<128x128xbf16>, vector<16x128xf32> -> vector<16x128xf32>
    %cst_50 = arith.constant dense<0.000000e+00> : vector<128xf32>
    %102 = vector.multi_reduction <add>, %101, %cst_50 [0] : vector<16x128xf32> to vector<128xf32>
    %103 = vector.shape_cast %102 : vector<128xf32> to vector<1x128xf32>
    %104 = arith.mulf %101, %101 : vector<16x128xf32>
    %cst_51 = arith.constant dense<0.000000e+00> : vector<128xf32>
    %105 = vector.multi_reduction <add>, %104, %cst_51 [0] : vector<16x128xf32> to vector<128xf32>
    %106 = vector.shape_cast %105 : vector<128xf32> to vector<1x128xf32>
    %cst_52 = arith.constant 1.600000e+01 : f32
    %107 = vector.broadcast %cst_52 : f32 to vector<1x128xf32>
    %108 = arith.mulf %107, %106 : vector<1x128xf32>
    %109 = arith.mulf %103, %103 : vector<1x128xf32>
    %110 = arith.subf %108, %109 : vector<1x128xf32>
    %cst_53 = arith.constant 0.000000e+00 : f32
    %111 = vector.broadcast %cst_53 : f32 to vector<1x128xf32>
    %112 = arith.maximumf %110, %111 : vector<1x128xf32>
    %cst_54 = arith.constant 2.560000e-03 : f32
    %113 = vector.broadcast %cst_54 : f32 to vector<1x128xf32>
    %114 = arith.addf %112, %113 : vector<1x128xf32>
    %115 = math.rsqrt %114 : vector<1x128xf32>
    %c3_55 = arith.constant 3 : index
    %c0_56 = arith.constant 0 : index
    %116 = vector.load %arg2[%c3_55, %c0_56] : memref<16x128xf32, #tpu.memory_space<vmem>>, vector<1x128xf32>
    %117 = arith.mulf %116, %115 : vector<1x128xf32>
    %cst_57 = arith.constant 1.600000e+01 : f32
    %118 = vector.broadcast %cst_57 : f32 to vector<1x128xf32>
    %119 = arith.mulf %117, %118 : vector<1x128xf32>
    %c11 = arith.constant 11 : index
    %c0_58 = arith.constant 0 : index
    %120 = vector.load %arg2[%c11, %c0_58] : memref<16x128xf32, #tpu.memory_space<vmem>>, vector<1x128xf32>
    %121 = arith.mulf %103, %117 : vector<1x128xf32>
    %122 = arith.subf %120, %121 : vector<1x128xf32>
    %123 = vector.broadcast %119 : vector<1x128xf32> to vector<16x128xf32>
    %124 = arith.mulf %101, %123 : vector<16x128xf32>
    %125 = vector.broadcast %122 : vector<1x128xf32> to vector<16x128xf32>
    %126 = arith.addf %124, %125 : vector<16x128xf32>
    %cst_59 = arith.constant 0.000000e+00 : f32
    %127 = vector.broadcast %cst_59 : f32 to vector<16x128xf32>
    %128 = arith.maximumf %126, %127 : vector<16x128xf32>
    %129 = arith.truncf %128 : vector<16x128xf32> to vector<16x128xbf16>
    %c4 = arith.constant 4 : index
    %c0_60 = arith.constant 0 : index
    %c0_61 = arith.constant 0 : index
    %130 = vector.load %arg1[%c4, %c0_60, %c0_61] : memref<8x128x128xbf16, #tpu.memory_space<vmem>>, vector<1x128x128xbf16>
    %131 = vector.shape_cast %130 : vector<1x128x128xbf16> to vector<128x128xbf16>
    %cst_62 = arith.constant dense<0.000000e+00> : vector<16x128xf32>
    %132 = tpu.matmul %129, %131, %cst_62 {dimension_numbers = #tpu.dot_dimension_numbers<[1], [0], [0], [1], [0, 0, 1, 1], [], []>} : vector<16x128xbf16>, vector<128x128xbf16>, vector<16x128xf32> -> vector<16x128xf32>
    %cst_63 = arith.constant dense<0.000000e+00> : vector<128xf32>
    %133 = vector.multi_reduction <add>, %132, %cst_63 [0] : vector<16x128xf32> to vector<128xf32>
    %134 = vector.shape_cast %133 : vector<128xf32> to vector<1x128xf32>
    %135 = arith.mulf %132, %132 : vector<16x128xf32>
    %cst_64 = arith.constant dense<0.000000e+00> : vector<128xf32>
    %136 = vector.multi_reduction <add>, %135, %cst_64 [0] : vector<16x128xf32> to vector<128xf32>
    %137 = vector.shape_cast %136 : vector<128xf32> to vector<1x128xf32>
    %cst_65 = arith.constant 1.600000e+01 : f32
    %138 = vector.broadcast %cst_65 : f32 to vector<1x128xf32>
    %139 = arith.mulf %138, %137 : vector<1x128xf32>
    %140 = arith.mulf %134, %134 : vector<1x128xf32>
    %141 = arith.subf %139, %140 : vector<1x128xf32>
    %cst_66 = arith.constant 0.000000e+00 : f32
    %142 = vector.broadcast %cst_66 : f32 to vector<1x128xf32>
    %143 = arith.maximumf %141, %142 : vector<1x128xf32>
    %cst_67 = arith.constant 2.560000e-03 : f32
    %144 = vector.broadcast %cst_67 : f32 to vector<1x128xf32>
    %145 = arith.addf %143, %144 : vector<1x128xf32>
    %146 = math.rsqrt %145 : vector<1x128xf32>
    %c4_68 = arith.constant 4 : index
    %c0_69 = arith.constant 0 : index
    %147 = vector.load %arg2[%c4_68, %c0_69] : memref<16x128xf32, #tpu.memory_space<vmem>>, vector<1x128xf32>
    %148 = arith.mulf %147, %146 : vector<1x128xf32>
    %cst_70 = arith.constant 1.600000e+01 : f32
    %149 = vector.broadcast %cst_70 : f32 to vector<1x128xf32>
    %150 = arith.mulf %148, %149 : vector<1x128xf32>
    %c12 = arith.constant 12 : index
    %c0_71 = arith.constant 0 : index
    %151 = vector.load %arg2[%c12, %c0_71] : memref<16x128xf32, #tpu.memory_space<vmem>>, vector<1x128xf32>
    %152 = arith.mulf %134, %148 : vector<1x128xf32>
    %153 = arith.subf %151, %152 : vector<1x128xf32>
    %154 = vector.broadcast %150 : vector<1x128xf32> to vector<16x128xf32>
    %155 = arith.mulf %132, %154 : vector<16x128xf32>
    %156 = vector.broadcast %153 : vector<1x128xf32> to vector<16x128xf32>
    %157 = arith.addf %155, %156 : vector<16x128xf32>
    %cst_72 = arith.constant 0.000000e+00 : f32
    %158 = vector.broadcast %cst_72 : f32 to vector<16x128xf32>
    %159 = arith.maximumf %157, %158 : vector<16x128xf32>
    %160 = arith.truncf %159 : vector<16x128xf32> to vector<16x128xbf16>
    %c5 = arith.constant 5 : index
    %c0_73 = arith.constant 0 : index
    %c0_74 = arith.constant 0 : index
    %161 = vector.load %arg1[%c5, %c0_73, %c0_74] : memref<8x128x128xbf16, #tpu.memory_space<vmem>>, vector<1x128x128xbf16>
    %162 = vector.shape_cast %161 : vector<1x128x128xbf16> to vector<128x128xbf16>
    %cst_75 = arith.constant dense<0.000000e+00> : vector<16x128xf32>
    %163 = tpu.matmul %160, %162, %cst_75 {dimension_numbers = #tpu.dot_dimension_numbers<[1], [0], [0], [1], [0, 0, 1, 1], [], []>} : vector<16x128xbf16>, vector<128x128xbf16>, vector<16x128xf32> -> vector<16x128xf32>
    %cst_76 = arith.constant dense<0.000000e+00> : vector<128xf32>
    %164 = vector.multi_reduction <add>, %163, %cst_76 [0] : vector<16x128xf32> to vector<128xf32>
    %165 = vector.shape_cast %164 : vector<128xf32> to vector<1x128xf32>
    %166 = arith.mulf %163, %163 : vector<16x128xf32>
    %cst_77 = arith.constant dense<0.000000e+00> : vector<128xf32>
    %167 = vector.multi_reduction <add>, %166, %cst_77 [0] : vector<16x128xf32> to vector<128xf32>
    %168 = vector.shape_cast %167 : vector<128xf32> to vector<1x128xf32>
    %cst_78 = arith.constant 1.600000e+01 : f32
    %169 = vector.broadcast %cst_78 : f32 to vector<1x128xf32>
    %170 = arith.mulf %169, %168 : vector<1x128xf32>
    %171 = arith.mulf %165, %165 : vector<1x128xf32>
    %172 = arith.subf %170, %171 : vector<1x128xf32>
    %cst_79 = arith.constant 0.000000e+00 : f32
    %173 = vector.broadcast %cst_79 : f32 to vector<1x128xf32>
    %174 = arith.maximumf %172, %173 : vector<1x128xf32>
    %cst_80 = arith.constant 2.560000e-03 : f32
    %175 = vector.broadcast %cst_80 : f32 to vector<1x128xf32>
    %176 = arith.addf %174, %175 : vector<1x128xf32>
    %177 = math.rsqrt %176 : vector<1x128xf32>
    %c5_81 = arith.constant 5 : index
    %c0_82 = arith.constant 0 : index
    %178 = vector.load %arg2[%c5_81, %c0_82] : memref<16x128xf32, #tpu.memory_space<vmem>>, vector<1x128xf32>
    %179 = arith.mulf %178, %177 : vector<1x128xf32>
    %cst_83 = arith.constant 1.600000e+01 : f32
    %180 = vector.broadcast %cst_83 : f32 to vector<1x128xf32>
    %181 = arith.mulf %179, %180 : vector<1x128xf32>
    %c13 = arith.constant 13 : index
    %c0_84 = arith.constant 0 : index
    %182 = vector.load %arg2[%c13, %c0_84] : memref<16x128xf32, #tpu.memory_space<vmem>>, vector<1x128xf32>
    %183 = arith.mulf %165, %179 : vector<1x128xf32>
    %184 = arith.subf %182, %183 : vector<1x128xf32>
    %185 = vector.broadcast %181 : vector<1x128xf32> to vector<16x128xf32>
    %186 = arith.mulf %163, %185 : vector<16x128xf32>
    %187 = vector.broadcast %184 : vector<1x128xf32> to vector<16x128xf32>
    %188 = arith.addf %186, %187 : vector<16x128xf32>
    %cst_85 = arith.constant 0.000000e+00 : f32
    %189 = vector.broadcast %cst_85 : f32 to vector<16x128xf32>
    %190 = arith.maximumf %188, %189 : vector<16x128xf32>
    %191 = arith.truncf %190 : vector<16x128xf32> to vector<16x128xbf16>
    %c6 = arith.constant 6 : index
    %c0_86 = arith.constant 0 : index
    %c0_87 = arith.constant 0 : index
    %192 = vector.load %arg1[%c6, %c0_86, %c0_87] : memref<8x128x128xbf16, #tpu.memory_space<vmem>>, vector<1x128x128xbf16>
    %193 = vector.shape_cast %192 : vector<1x128x128xbf16> to vector<128x128xbf16>
    %cst_88 = arith.constant dense<0.000000e+00> : vector<16x128xf32>
    %194 = tpu.matmul %191, %193, %cst_88 {dimension_numbers = #tpu.dot_dimension_numbers<[1], [0], [0], [1], [0, 0, 1, 1], [], []>} : vector<16x128xbf16>, vector<128x128xbf16>, vector<16x128xf32> -> vector<16x128xf32>
    %cst_89 = arith.constant dense<0.000000e+00> : vector<128xf32>
    %195 = vector.multi_reduction <add>, %194, %cst_89 [0] : vector<16x128xf32> to vector<128xf32>
    %196 = vector.shape_cast %195 : vector<128xf32> to vector<1x128xf32>
    %197 = arith.mulf %194, %194 : vector<16x128xf32>
    %cst_90 = arith.constant dense<0.000000e+00> : vector<128xf32>
    %198 = vector.multi_reduction <add>, %197, %cst_90 [0] : vector<16x128xf32> to vector<128xf32>
    %199 = vector.shape_cast %198 : vector<128xf32> to vector<1x128xf32>
    %cst_91 = arith.constant 1.600000e+01 : f32
    %200 = vector.broadcast %cst_91 : f32 to vector<1x128xf32>
    %201 = arith.mulf %200, %199 : vector<1x128xf32>
    %202 = arith.mulf %196, %196 : vector<1x128xf32>
    %203 = arith.subf %201, %202 : vector<1x128xf32>
    %cst_92 = arith.constant 0.000000e+00 : f32
    %204 = vector.broadcast %cst_92 : f32 to vector<1x128xf32>
    %205 = arith.maximumf %203, %204 : vector<1x128xf32>
    %cst_93 = arith.constant 2.560000e-03 : f32
    %206 = vector.broadcast %cst_93 : f32 to vector<1x128xf32>
    %207 = arith.addf %205, %206 : vector<1x128xf32>
    %208 = math.rsqrt %207 : vector<1x128xf32>
    %c6_94 = arith.constant 6 : index
    %c0_95 = arith.constant 0 : index
    %209 = vector.load %arg2[%c6_94, %c0_95] : memref<16x128xf32, #tpu.memory_space<vmem>>, vector<1x128xf32>
    %210 = arith.mulf %209, %208 : vector<1x128xf32>
    %cst_96 = arith.constant 1.600000e+01 : f32
    %211 = vector.broadcast %cst_96 : f32 to vector<1x128xf32>
    %212 = arith.mulf %210, %211 : vector<1x128xf32>
    %c14 = arith.constant 14 : index
    %c0_97 = arith.constant 0 : index
    %213 = vector.load %arg2[%c14, %c0_97] : memref<16x128xf32, #tpu.memory_space<vmem>>, vector<1x128xf32>
    %214 = arith.mulf %196, %210 : vector<1x128xf32>
    %215 = arith.subf %213, %214 : vector<1x128xf32>
    %216 = vector.broadcast %212 : vector<1x128xf32> to vector<16x128xf32>
    %217 = arith.mulf %194, %216 : vector<16x128xf32>
    %218 = vector.broadcast %215 : vector<1x128xf32> to vector<16x128xf32>
    %219 = arith.addf %217, %218 : vector<16x128xf32>
    %cst_98 = arith.constant 0.000000e+00 : f32
    %220 = vector.broadcast %cst_98 : f32 to vector<16x128xf32>
    %221 = arith.maximumf %219, %220 : vector<16x128xf32>
    %222 = arith.truncf %221 : vector<16x128xf32> to vector<16x128xbf16>
    %c7 = arith.constant 7 : index
    %c0_99 = arith.constant 0 : index
    %c0_100 = arith.constant 0 : index
    %223 = vector.load %arg1[%c7, %c0_99, %c0_100] : memref<8x128x128xbf16, #tpu.memory_space<vmem>>, vector<1x128x128xbf16>
    %224 = vector.shape_cast %223 : vector<1x128x128xbf16> to vector<128x128xbf16>
    %cst_101 = arith.constant dense<0.000000e+00> : vector<16x128xf32>
    %225 = tpu.matmul %222, %224, %cst_101 {dimension_numbers = #tpu.dot_dimension_numbers<[1], [0], [0], [1], [0, 0, 1, 1], [], []>} : vector<16x128xbf16>, vector<128x128xbf16>, vector<16x128xf32> -> vector<16x128xf32>
    %226 = vector.extract_strided_slice %225 {offsets = [0, 0], sizes = [16, 1], strides = [1, 1]} : vector<16x128xf32> to vector<16x1xf32>
    %c0_102 = arith.constant 0 : index
    %227 = memref.load %arg3[%c0_102] : memref<1xf32, #tpu.memory_space<smem>>
    %228 = vector.broadcast %227 : f32 to vector<16x1xf32>
    %229 = arith.addf %226, %228 : vector<16x1xf32>
    %c0_103 = arith.constant 0 : index
    %c0_104 = arith.constant 0 : index
    %230 = vector.load %arg4[%c0_103, %c0_104] : memref<16x1xf32, #tpu.memory_space<vmem>>, vector<16x1xf32>
    tpu.vector_store %arg4[%c0_103, %c0_104], %229 {strides = array<i32>} : memref<16x1xf32, #tpu.memory_space<vmem>>, vector<16x1xf32>,
    return
  }
}

</mosaic_0001>

<llo_original>
// kernel: regression_model_latency.1
$region0: #{regression_model_latency.1}
  #allocation0 [shape = 'u32[]', space=smem, size = 0x4, offset = 0x4, fixed_abs, tag = 'smem constant byte address 0x4 - core index']
  #allocation1 [shape = 'u32[144,128]{1,0:T(1,128)}', space=vmem, size = 0x12000, scoped, tag = 'internal scratch']
  #allocation2 [shape = 'f32[16,128]{1,0:T(8,128)}', space=vmem, size = 0x2000, scoped, tag = 'scratch operand']
  #allocation3 [shape = 'f32[1]{0:T(128)S(6)}', space=smem, size = 0x200, scoped, tag = 'scoped memory for regression_model_latency.1']
  %s0 = inlined_call_operand.vmem [shape: f32[16,7], index: 0, kind: input, shape index: {}]
  %s1 = inlined_call_operand.hbm [shape: bf16[8,128,128], index: 1, kind: input, shape index: {}]
  %s2 = inlined_call_operand.vmem [shape: f32[16,128], index: 2, kind: input, shape index: {}]
  %s3 = inlined_call_operand.<no memory space> [shape: f32[1], index: 3, kind: input, shape index: {}]
  %s4 = inlined_call_operand.vmem [shape: f32[16,1], index: 4, kind: output, shape index: {}]
  %s5 = sld [smem:[#allocation0]]
  $region30: #{regression_model_latency.1} parent=0
    _
  %s7 = ssub.s32 1, %s5
  %s8 = scalar_select 0, %s7, %s5
  %9 = sst [smem:[#allocation3]] %s3
  $region1: #{regression_model_latency.1} parent=0
    #allocation4 [shape = 'u8[262144]{0}', space=vmem, size = 0x40000, scoped, tag = 'input window, operand 1, single buffered']
    #allocation5 [shape = 's32[1]{0}', space=sflag, size = 0x4, scoped, tag = 'scoped memory for regression_model_latency.1']
    %10 = vsyncpa [#allocation5], 0
    // Predicated region
    $region2: #{regression_model_latency.1} parent=1 // pred_check
      _
    $region3: #{regression_model_latency.1} parent=1 // pred_check_branch
      %12 = sbr.rel (0) target = $region5
    $region4: #{regression_model_latency.1} parent=1 // pred_region
      _
    $region5: #{regression_model_latency.1} parent=1 // pred_fallthru
      _
    // Predicated region
    $region6: #{regression_model_latency.1} parent=1 // pred_check
      _
    $region7: #{regression_model_latency.1} parent=1 // pred_check_branch
      %14 = sbr.rel (0) target = $region9
    $region8: #{regression_model_latency.1} parent=1 // pred_region
      %s16 = ssub.s32 8192, 8192
      %17 = vsyncadd [#allocation5], %s16
      %s18 = sshll.u32 [#allocation4], 4
      %s19 = int_to_ptr.vmem [resolvable:$true] %s18
      %24 = dma.hbm_to_vmem [thread:$0]  %s1, 8192, %s19, [#allocation5], 64, 64, 4
    $region9: #{regression_model_latency.1} parent=1 // pred_fallthru
      _
    // Predicated region
    $region10: #{regression_model_latency.1} parent=1 // pred_check
      _
    $region11: #{regression_model_latency.1} parent=1 // pred_check_branch
      %26 = sbr.rel (0) target = $region13
    $region12: #{regression_model_latency.1} parent=1 // pred_region
      _
    $region13: #{regression_model_latency.1} parent=1 // pred_fallthru
      _
    // Predicated region
    $region14: #{regression_model_latency.1} parent=1 // pred_check
      _
    $region15: #{regression_model_latency.1} parent=1 // pred_check_branch
      %28 = sbr.rel (0) target = $region17
    $region16: #{regression_model_latency.1} parent=1 // pred_region
      _
    $region17: #{regression_model_latency.1} parent=1 // pred_fallthru
      _
    // Predicated region
    $region18: #{regression_model_latency.1} parent=1 // pred_check
      _
    $region19: #{regression_model_latency.1} parent=1 // pred_check_branch
      %30 = sbr.rel (0) target = $region21
    $region20: #{regression_model_latency.1} parent=1 // pred_region
      %31 = dma.done [#allocation5], 8192
    $region21: #{regression_model_latency.1} parent=1 // pred_fallthru
      _
    %33 = vst [vmem:[#allocation2] sm:$0xff] 0.0
    %34 = vst [vmem:[#allocation2 + $0x8] sm:$0xff] 0.0
    %v35 = vld [vmem:[%s0] sm:$0xff]
    %v36 = vld [vmem:[%s0 + $0x8] sm:$0xff]
    %vm37 = vcmask 56320
    %38 = vst.msk [vmem:[#allocation2] sm:$0xff] %vm37, %v35
    %39 = vst.msk [vmem:[#allocation2 + $0x8] sm:$0xff] %vm37, %v36
    %v40 = vld [vmem:[#allocation2] sm:$0xff]
    %v41 = vld [vmem:[#allocation2 + $0x8] sm:$0xff]
    %v42 = vpack.c.bf16 %v41, %v40
    %v43 = vld [vmem:[#allocation4] sm:$0xf]
    %v44 = vld [vmem:[#allocation4 + $0x4] sm:$0xf]
    %v45 = vld [vmem:[#allocation4 + $0x8] sm:$0xf]
    %v46 = vld [vmem:[#allocation4 + $0xc] sm:$0xf]
    %v47 = vld [vmem:[#allocation4 + $0x10] sm:$0xf]
    %v48 = vld [vmem:[#allocation4 + $0x14] sm:$0xf]
    %v49 = vld [vmem:[#allocation4 + $0x18] sm:$0xf]
    %v50 = vld [vmem:[#allocation4 + $0x1c] sm:$0xf]
    %v51 = vld [vmem:[#allocation4 + $0x20] sm:$0xf]
    %v52 = vld [vmem:[#allocation4 + $0x24] sm:$0xf]
    %v53 = vld [vmem:[#allocation4 + $0x28] sm:$0xf]
    %v54 = vld [vmem:[#allocation4 + $0x2c] sm:$0xf]
    %v55 = vld [vmem:[#allocation4 + $0x30] sm:$0xf]
    %v56 = vld [vmem:[#allocation4 + $0x34] sm:$0xf]
    %v57 = vld [vmem:[#allocation4 + $0x38] sm:$0xf]
    %v58 = vld [vmem:[#allocation4 + $0x3c] sm:$0xf]
    %v75 = vunpack.c.l.b16 %v43
    %v76 = vunpack.c.l.b16 %v44
    %v77 = vunpack.c.l.b16 %v45
    %v78 = vunpack.c.l.b16 %v46
    %v79 = vunpack.c.l.b16 %v47
    %v80 = vunpack.c.l.b16 %v48
    %v81 = vunpack.c.l.b16 %v49
    %v82 = vunpack.c.l.b16 %v50
    %v83 = vunpack.c.l.b16 %v51
    %v84 = vunpack.c.l.b16 %v52
    %v85 = vunpack.c.l.b16 %v53
    %v86 = vunpack.c.l.b16 %v54
    %v87 = vunpack.c.l.b16 %v55
    %v88 = vunpack.c.l.b16 %v56
    %v89 = vunpack.c.l.b16 %v57
    %v90 = vunpack.c.l.b16 %v58
    %v91 = vpack.c.b16 %v76, %v75
    %v92 = vpack.c.b16 %v78, %v77
    %v93 = vpack.c.b16 %v80, %v79
    %v94 = vpack.c.b16 %v82, %v81
    %v95 = vpack.c.b16 %v84, %v83
    %v96 = vpack.c.b16 %v86, %v85
    %v97 = vpack.c.b16 %v88, %v87
    %v98 = vpack.c.b16 %v90, %v89
    %107 = vmatprep.subr.bf16.mxu0 0
    %108 = vmatpush1.bf16.msra.mxu0 %v91
    %109 = vmatprep.subr.bf16.mxu0 0
    %110 = vmatpush1.bf16.msra.mxu0 %v92
    %111 = vmatprep.subr.bf16.mxu0 0
    %112 = vmatpush1.bf16.msra.mxu0 %v93
    %113 = vmatprep.subr.bf16.mxu0 0
    %114 = vmatpush1.bf16.msra.mxu0 %v94
    %115 = vmatprep.subr.bf16.mxu0 0
    %116 = vmatpush1.bf16.msra.mxu0 %v95
    %117 = vmatprep.subr.bf16.mxu0 0
    %118 = vmatpush1.bf16.msra.mxu0 %v96
    %119 = vmatprep.subr.bf16.mxu0 0
    %120 = vmatpush1.bf16.msra.mxu0 %v97
    %121 = vmatprep.subr.bf16.mxu0 0
    %122 = vmatpush1.bf16.msra.mxu0 %v98
    %123 = vmatprep.subr.bf16.mxu0 0
    %124 = vmatpush1.bf16.msra.mxu0 0
    %125 = vmatprep.subr.bf16.mxu0 0
    %126 = vmatpush1.bf16.msra.mxu0 0
    %127 = vmatprep.subr.bf16.mxu0 0
    %128 = vmatpush1.bf16.msra.mxu0 0
    %129 = vmatprep.subr.bf16.mxu0 0
    %130 = vmatpush1.bf16.msra.mxu0 0
    %131 = vmatprep.subr.bf16.mxu0 0
    %132 = vmatpush1.bf16.msra.mxu0 0
    %133 = vmatprep.subr.bf16.mxu0 0
    %134 = vmatpush1.bf16.msra.mxu0 0
    %135 = vmatprep.subr.bf16.mxu0 0
    %136 = vmatpush1.bf16.msra.mxu0 0
    %137 = vmatprep.subr.bf16.mxu0 0
    %138 = vmatpush1.bf16.msra.mxu0 0
    %139 = vmatprep.mubr.bf16.mxu0 0
    %140 = vmatmul.mubr.bf16.gmra.mrb[0].mxu0 %v42
    %v141 = vpop.f32.mrb[0].mxu0
    %v142 = vadd.f32 0.0, %v141
    %v143 = vpop.f32.mrb[0].mxu0
    %v144 = vpop.f32.mrb[0].mxu0
    %v145 = vadd.f32 0.0, %v144
    %v146 = vpop.f32.mrb[0].mxu0
    %147 = vdwg.mxu0
    %v148 = vadd.f32 %v142, %v145
    %v149 = vrot.slane %v148, 4
    %v150 = vadd.f32 %v148, %v149
    %v151 = vrot.slane %v150, 2
    %v152 = vadd.f32 %v150, %v151
    %v153 = vrot.slane %v152, 1
    %v154 = vadd.f32 %v152, %v153
    %v155 = vmul.f32 %v142, %v142
    %v156 = vmul.f32 %v145, %v145
    %v157 = vadd.f32 %v155, %v156
    %v158 = vrot.slane %v157, 4
    %v159 = vadd.f32 %v157, %v158
    %v160 = vrot.slane %v159, 2
    %v161 = vadd.f32 %v159, %v160
    %v162 = vrot.slane %v161, 1
    %v163 = vadd.f32 %v161, %v162
    %v164 = vmul.f32 %v163, 16.0
    %v165 = vmul.f32 %v154, %v154
    %v166 = vsub.f32 %v164, %v165
    %v167 = vmax.f32 %v166, 0.0
    %v168 = vadd.f32 %v167, 0.00256
    %v169 = vrsqrt.pop %v168
    %v170 = vld [vmem:[%s2] sm:$0x1]
    %v171 = vmul.f32 %v170, %v169
    %v172 = vmul.f32 %v171, 16.0
    %v173 = vld [vmem:[%s2 + $0x8] sm:$0x1]
    %v174 = vmul.f32 %v154, %v171
    %v175 = vsub.f32 %v173, %v174
    %v176 = vlaneseq
    %v177 = vshrl.u32 %v176, 7
    %v178 = vsub.s32 0, %v177
    %v179 = vrot.slane %v172, %v178
    %v180 = vmul.f32 %v142, %v179
    %v181 = vmul.f32 %v145, %v179
    %v182 = vlaneseq
    %v183 = vshrl.u32 %v182, 7
    %v184 = vsub.s32 0, %v183
    %v185 = vrot.slane %v175, %v184
    %v186 = vadd.f32 %v180, %v185
    %v187 = vadd.f32 %v181, %v185
    %v188 = vmax.f32 %v186, 0.0
    %v189 = vmax.f32 %v187, 0.0
    %v190 = vpack.c.bf16 %v189, %v188
    %s191 = scalar_lea.vmem [#allocation4], 64
    %v192 = vld [vmem:[%s191] sm:$0xf]
    %v193 = vld [vmem:[%s191 + $0x4] sm:$0xf]
    %v194 = vld [vmem:[%s191 + $0x8] sm:$0xf]
    %v195 = vld [vmem:[%s191 + $0xc] sm:$0xf]
    %v196 = vld [vmem:[%s191 + $0x10] sm:$0xf]
    %v197 = vld [vmem:[%s191 + $0x14] sm:$0xf]
    %v198 = vld [vmem:[%s191 + $0x18] sm:$0xf]
    %v199 = vld [vmem:[%s191 + $0x1c] sm:$0xf]
    %v200 = vld [vmem:[%s191 + $0x20] sm:$0xf]
    %v201 = vld [vmem:[%s191 + $0x24] sm:$0xf]
    %v202 = vld [vmem:[%s191 + $0x28] sm:$0xf]
    %v203 = vld [vmem:[%s191 + $0x2c] sm:$0xf]
    %v204 = vld [vmem:[%s191 + $0x30] sm:$0xf]
    %v205 = vld [vmem:[%s191 + $0x34] sm:$0xf]
    %v206 = vld [vmem:[%s191 + $0x38] sm:$0xf]
    %v207 = vld [vmem:[%s191 + $0x3c] sm:$0xf]
    %v224 = vunpack.c.l.b16 %v192
    %v225 = vunpack.c.l.b16 %v193
    %v226 = vunpack.c.l.b16 %v194
    %v227 = vunpack.c.l.b16 %v195
    %v228 = vunpack.c.l.b16 %v196
    %v229 = vunpack.c.l.b16 %v197
    %v230 = vunpack.c.l.b16 %v198
    %v231 = vunpack.c.l.b16 %v199
    %v232 = vunpack.c.l.b16 %v200
    %v233 = vunpack.c.l.b16 %v201
    %v234 = vunpack.c.l.b16 %v202
    %v235 = vunpack.c.l.b16 %v203
    %v236 = vunpack.c.l.b16 %v204
    %v237 = vunpack.c.l.b16 %v205
    %v238 = vunpack.c.l.b16 %v206
    %v239 = vunpack.c.l.b16 %v207
    %v240 = vpack.c.b16 %v225, %v224
    %v241 = vpack.c.b16 %v227, %v226
    %v242 = vpack.c.b16 %v229, %v228
    %v243 = vpack.c.b16 %v231, %v230
    %v244 = vpack.c.b16 %v233, %v232
    %v245 = vpack.c.b16 %v235, %v234
    %v246 = vpack.c.b16 %v237, %v236
    %v247 = vpack.c.b16 %v239, %v238
    %256 = vmatprep.subr.bf16.mxu0 0
    %257 = vmatpush1.bf16.msra.mxu0 %v240
    %258 = vmatprep.subr.bf16.mxu0 0
    %259 = vmatpush1.bf16.msra.mxu0 %v241
    %260 = vmatprep.subr.bf16.mxu0 0
    %261 = vmatpush1.bf16.msra.mxu0 %v242
    %262 = vmatprep.subr.bf16.mxu0 0
    %263 = vmatpush1.bf16.msra.mxu0 %v243
    %264 = vmatprep.subr.bf16.mxu0 0
    %265 = vmatpush1.bf16.msra.mxu0 %v244
    %266 = vmatprep.subr.bf16.mxu0 0
    %267 = vmatpush1.bf16.msra.mxu0 %v245
    %268 = vmatprep.subr.bf16.mxu0 0
    %269 = vmatpush1.bf16.msra.mxu0 %v246
    %270 = vmatprep.subr.bf16.mxu0 0
    %271 = vmatpush1.bf16.msra.mxu0 %v247
    %272 = vmatprep.subr.bf16.mxu0 0
    %273 = vmatpush1.bf16.msra.mxu0 0
    %274 = vmatprep.subr.bf16.mxu0 0
    %275 = vmatpush1.bf16.msra.mxu0 0
    %276 = vmatprep.subr.bf16.mxu0 0
    %277 = vmatpush1.bf16.msra.mxu0 0
    %278 = vmatprep.subr.bf16.mxu0 0
    %279 = vmatpush1.bf16.msra.mxu0 0
    %280 = vmatprep.subr.bf16.mxu0 0
    %281 = vmatpush1.bf16.msra.mxu0 0
    %282 = vmatprep.subr.bf16.mxu0 0
    %283 = vmatpush1.bf16.msra.mxu0 0
    %284 = vmatprep.subr.bf16.mxu0 0
    %285 = vmatpush1.bf16.msra.mxu0 0
    %286 = vmatprep.subr.bf16.mxu0 0
    %287 = vmatpush1.bf16.msra.mxu0 0
    %288 = vmatprep.mubr.bf16.mxu0 0
    %289 = vmatmul.mubr.bf16.gmra.mrb[0].mxu0 %v190
    %v290 = vpop.f32.mrb[0].mxu0
    %v291 = vadd.f32 0.0, %v290
    %v292 = vpop.f32.mrb[0].mxu0
    %v293 = vpop.f32.mrb[0].mxu0
    %v294 = vadd.f32 0.0, %v293
    %v295 = vpop.f32.mrb[0].mxu0
    %296 = vdwg.mxu0
    %v297 = vadd.f32 %v291, %v294
    %v298 = vrot.slane %v297, 4
    %v299 = vadd.f32 %v297, %v298
    %v300 = vrot.slane %v299, 2
    %v301 = vadd.f32 %v299, %v300
    %v302 = vrot.slane %v301, 1
    %v303 = vadd.f32 %v301, %v302
    %v304 = vmul.f32 %v291, %v291
    %v305 = vmul.f32 %v294, %v294
    %v306 = vadd.f32 %v304, %v305
    %v307 = vrot.slane %v306, 4
    %v308 = vadd.f32 %v306, %v307
    %v309 = vrot.slane %v308, 2
    %v310 = vadd.f32 %v308, %v309
    %v311 = vrot.slane %v310, 1
    %v312 = vadd.f32 %v310, %v311
    %v313 = vmul.f32 %v312, 16.0
    %v314 = vmul.f32 %v303, %v303
    %v315 = vsub.f32 %v313, %v314
    %v316 = vmax.f32 %v315, 0.0
    %v317 = vadd.f32 %v316, 0.00256
    %v318 = vrsqrt.pop %v317
    %v319 = vld [vmem:[%s2 + $0x1] sm:$0x1]
    %v320 = vmul.f32 %v319, %v318
    %v321 = vmul.f32 %v320, 16.0
    %v322 = vld [vmem:[%s2 + $0x9] sm:$0x1]
    %v323 = vmul.f32 %v303, %v320
    %v324 = vsub.f32 %v322, %v323
    %v325 = vlaneseq
    %v326 = vshrl.u32 %v325, 7
    %v327 = vsub.s32 0, %v326
    %v328 = vrot.slane %v321, %v327
    %v329 = vmul.f32 %v291, %v328
    %v330 = vmul.f32 %v294, %v328
    %v331 = vlaneseq
    %v332 = vshrl.u32 %v331, 7
    %v333 = vsub.s32 0, %v332
    %v334 = vrot.slane %v324, %v333
    %v335 = vadd.f32 %v329, %v334
    %v336 = vadd.f32 %v330, %v334
    %v337 = vmax.f32 %v335, 0.0
    %v338 = vmax.f32 %v336, 0.0
    %v339 = vpack.c.bf16 %v338, %v337
    %s340 = scalar_lea.vmem [#allocation4], 128
    %v341 = vld [vmem:[%s340] sm:$0xf]
    %v342 = vld [vmem:[%s340 + $0x4] sm:$0xf]
    %v343 = vld [vmem:[%s340 + $0x8] sm:$0xf]
    %v344 = vld [vmem:[%s340 + $0xc] sm:$0xf]
    %v345 = vld [vmem:[%s340 + $0x10] sm:$0xf]
    %v346 = vld [vmem:[%s340 + $0x14] sm:$0xf]
    %v347 = vld [vmem:[%s340 + $0x18] sm:$0xf]
    %v348 = vld [vmem:[%s340 + $0x1c] sm:$0xf]
    %v349 = vld [vmem:[%s340 + $0x20] sm:$0xf]
    %v350 = vld [vmem:[%s340 + $0x24] sm:$0xf]
    %v351 = vld [vmem:[%s340 + $0x28] sm:$0xf]
    %v352 = vld [vmem:[%s340 + $0x2c] sm:$0xf]
    %v353 = vld [vmem:[%s340 + $0x30] sm:$0xf]
    %v354 = vld [vmem:[%s340 + $0x34] sm:$0xf]
    %v355 = vld [vmem:[%s340 + $0x38] sm:$0xf]
    %v356 = vld [vmem:[%s340 + $0x3c] sm:$0xf]
    %v373 = vunpack.c.l.b16 %v341
    %v374 = vunpack.c.l.b16 %v342
    %v375 = vunpack.c.l.b16 %v343
    %v376 = vunpack.c.l.b16 %v344
    %v377 = vunpack.c.l.b16 %v345
    %v378 = vunpack.c.l.b16 %v346
    %v379 = vunpack.c.l.b16 %v347
    %v380 = vunpack.c.l.b16 %v348
    %v381 = vunpack.c.l.b16 %v349
    %v382 = vunpack.c.l.b16 %v350
    %v383 = vunpack.c.l.b16 %v351
    %v384 = vunpack.c.l.b16 %v352
    %v385 = vunpack.c.l.b16 %v353
    %v386 = vunpack.c.l.b16 %v354
    %v387 = vunpack.c.l.b16 %v355
    %v388 = vunpack.c.l.b16 %v356
    %v389 = vpack.c.b16 %v374, %v373
    %v390 = vpack.c.b16 %v376, %v375
    %v391 = vpack.c.b16 %v378, %v377
    %v392 = vpack.c.b16 %v380, %v379
    %v393 = vpack.c.b16 %v382, %v381
    %v394 = vpack.c.b16 %v384, %v383
    %v395 = vpack.c.b16 %v386, %v385
    %v396 = vpack.c.b16 %v388, %v387
    %405 = vmatprep.subr.bf16.mxu0 0
    %406 = vmatpush1.bf16.msra.mxu0 %v389
    %407 = vmatprep.subr.bf16.mxu0 0
    %408 = vmatpush1.bf16.msra.mxu0 %v390
    %409 = vmatprep.subr.bf16.mxu0 0
    %410 = vmatpush1.bf16.msra.mxu0 %v391
    %411 = vmatprep.subr.bf16.mxu0 0
    %412 = vmatpush1.bf16.msra.mxu0 %v392
    %413 = vmatprep.subr.bf16.mxu0 0
    %414 = vmatpush1.bf16.msra.mxu0 %v393
    %415 = vmatprep.subr.bf16.mxu0 0
    %416 = vmatpush1.bf16.msra.mxu0 %v394
    %417 = vmatprep.subr.bf16.mxu0 0
    %418 = vmatpush1.bf16.msra.mxu0 %v395
    %419 = vmatprep.subr.bf16.mxu0 0
    %420 = vmatpush1.bf16.msra.mxu0 %v396
    %421 = vmatprep.subr.bf16.mxu0 0
    %422 = vmatpush1.bf16.msra.mxu0 0
    %423 = vmatprep.subr.bf16.mxu0 0
    %424 = vmatpush1.bf16.msra.mxu0 0
    %425 = vmatprep.subr.bf16.mxu0 0
    %426 = vmatpush1.bf16.msra.mxu0 0
    %427 = vmatprep.subr.bf16.mxu0 0
    %428 = vmatpush1.bf16.msra.mxu0 0
    %429 = vmatprep.subr.bf16.mxu0 0
    %430 = vmatpush1.bf16.msra.mxu0 0
    %431 = vmatprep.subr.bf16.mxu0 0
    %432 = vmatpush1.bf16.msra.mxu0 0
    %433 = vmatprep.subr.bf16.mxu0 0
    %434 = vmatpush1.bf16.msra.mxu0 0
    %435 = vmatprep.subr.bf16.mxu0 0
    %436 = vmatpush1.bf16.msra.mxu0 0
    %437 = vmatprep.mubr.bf16.mxu0 0
    %438 = vmatmul.mubr.bf16.gmra.mrb[0].mxu0 %v339
    %v439 = vpop.f32.mrb[0].mxu0
    %v440 = vadd.f32 0.0, %v439
    %v441 = vpop.f32.mrb[0].mxu0
    %v442 = vpop.f32.mrb[0].mxu0
    %v443 = vadd.f32 0.0, %v442
    %v444 = vpop.f32.mrb[0].mxu0
    %445 = vdwg.mxu0
    %v446 = vadd.f32 %v440, %v443
    %v447 = vrot.slane %v446, 4
    %v448 = vadd.f32 %v446, %v447
    %v449 = vrot.slane %v448, 2
    %v450 = vadd.f32 %v448, %v449
    %v451 = vrot.slane %v450, 1
    %v452 = vadd.f32 %v450, %v451
    %v453 = vmul.f32 %v440, %v440
    %v454 = vmul.f32 %v443, %v443
    %v455 = vadd.f32 %v453, %v454
    %v456 = vrot.slane %v455, 4
    %v457 = vadd.f32 %v455, %v456
    %v458 = vrot.slane %v457, 2
    %v459 = vadd.f32 %v457, %v458
    %v460 = vrot.slane %v459, 1
    %v461 = vadd.f32 %v459, %v460
    %v462 = vmul.f32 %v461, 16.0
    %v463 = vmul.f32 %v452, %v452
    %v464 = vsub.f32 %v462, %v463
    %v465 = vmax.f32 %v464, 0.0
    %v466 = vadd.f32 %v465, 0.00256
    %v467 = vrsqrt.pop %v466
    %v468 = vld [vmem:[%s2 + $0x2] sm:$0x1]
    %v469 = vmul.f32 %v468, %v467
    %v470 = vmul.f32 %v469, 16.0
    %v471 = vld [vmem:[%s2 + $0xa] sm:$0x1]
    %v472 = vmul.f32 %v452, %v469
    %v473 = vsub.f32 %v471, %v472
    %v474 = vlaneseq
    %v475 = vshrl.u32 %v474, 7
    %v476 = vsub.s32 0, %v475
    %v477 = vrot.slane %v470, %v476
    %v478 = vmul.f32 %v440, %v477
    %v479 = vmul.f32 %v443, %v477
    %v480 = vlaneseq
    %v481 = vshrl.u32 %v480, 7
    %v482 = vsub.s32 0, %v481
    %v483 = vrot.slane %v473, %v482
    %v484 = vadd.f32 %v478, %v483
    %v485 = vadd.f32 %v479, %v483
    %v486 = vmax.f32 %v484, 0.0
    %v487 = vmax.f32 %v485, 0.0
    %v488 = vpack.c.bf16 %v487, %v486
    %s489 = scalar_lea.vmem [#allocation4], 192
    %v490 = vld [vmem:[%s489] sm:$0xf]
    %v491 = vld [vmem:[%s489 + $0x4] sm:$0xf]
    %v492 = vld [vmem:[%s489 + $0x8] sm:$0xf]
    %v493 = vld [vmem:[%s489 + $0xc] sm:$0xf]
    %v494 = vld [vmem:[%s489 + $0x10] sm:$0xf]
    %v495 = vld [vmem:[%s489 + $0x14] sm:$0xf]
    %v496 = vld [vmem:[%s489 + $0x18] sm:$0xf]
    %v497 = vld [vmem:[%s489 + $0x1c] sm:$0xf]
    %v498 = vld [vmem:[%s489 + $0x20] sm:$0xf]
    %v499 = vld [vmem:[%s489 + $0x24] sm:$0xf]
    %v500 = vld [vmem:[%s489 + $0x28] sm:$0xf]
    %v501 = vld [vmem:[%s489 + $0x2c] sm:$0xf]
    %v502 = vld [vmem:[%s489 + $0x30] sm:$0xf]
    %v503 = vld [vmem:[%s489 + $0x34] sm:$0xf]
    %v504 = vld [vmem:[%s489 + $0x38] sm:$0xf]
    %v505 = vld [vmem:[%s489 + $0x3c] sm:$0xf]
    %v522 = vunpack.c.l.b16 %v490
    %v523 = vunpack.c.l.b16 %v491
    %v524 = vunpack.c.l.b16 %v492
    %v525 = vunpack.c.l.b16 %v493
    %v526 = vunpack.c.l.b16 %v494
    %v527 = vunpack.c.l.b16 %v495
    %v528 = vunpack.c.l.b16 %v496
    %v529 = vunpack.c.l.b16 %v497
    %v530 = vunpack.c.l.b16 %v498
    %v531 = vunpack.c.l.b16 %v499
    %v532 = vunpack.c.l.b16 %v500
    %v533 = vunpack.c.l.b16 %v501
    %v534 = vunpack.c.l.b16 %v502
    %v535 = vunpack.c.l.b16 %v503
    %v536 = vunpack.c.l.b16 %v504
    %v537 = vunpack.c.l.b16 %v505
    %v538 = vpack.c.b16 %v523, %v522
    %v539 = vpack.c.b16 %v525, %v524
    %v540 = vpack.c.b16 %v527, %v526
    %v541 = vpack.c.b16 %v529, %v528
    %v542 = vpack.c.b16 %v531, %v530
    %v543 = vpack.c.b16 %v533, %v532
    %v544 = vpack.c.b16 %v535, %v534
    %v545 = vpack.c.b16 %v537, %v536
    %554 = vmatprep.subr.bf16.mxu0 0
    %555 = vmatpush1.bf16.msra.mxu0 %v538
    %556 = vmatprep.subr.bf16.mxu0 0
    %557 = vmatpush1.bf16.msra.mxu0 %v539
    %558 = vmatprep.subr.bf16.mxu0 0
    %559 = vmatpush1.bf16.msra.mxu0 %v540
    %560 = vmatprep.subr.bf16.mxu0 0
    %561 = vmatpush1.bf16.msra.mxu0 %v541
    %562 = vmatprep.subr.bf16.mxu0 0
    %563 = vmatpush1.bf16.msra.mxu0 %v542
    %564 = vmatprep.subr.bf16.mxu0 0
    %565 = vmatpush1.bf16.msra.mxu0 %v543
    %566 = vmatprep.subr.bf16.mxu0 0
    %567 = vmatpush1.bf16.msra.mxu0 %v544
    %568 = vmatprep.subr.bf16.mxu0 0
    %569 = vmatpush1.bf16.msra.mxu0 %v545
    %570 = vmatprep.subr.bf16.mxu0 0
    %571 = vmatpush1.bf16.msra.mxu0 0
    %572 = vmatprep.subr.bf16.mxu0 0
    %573 = vmatpush1.bf16.msra.mxu0 0
    %574 = vmatprep.subr.bf16.mxu0 0
    %575 = vmatpush1.bf16.msra.mxu0 0
    %576 = vmatprep.subr.bf16.mxu0 0
    %577 = vmatpush1.bf16.msra.mxu0 0
    %578 = vmatprep.subr.bf16.mxu0 0
    %579 = vmatpush1.bf16.msra.mxu0 0
    %580 = vmatprep.subr.bf16.mxu0 0
    %581 = vmatpush1.bf16.msra.mxu0 0
    %582 = vmatprep.subr.bf16.mxu0 0
    %583 = vmatpush1.bf16.msra.mxu0 0
    %584 = vmatprep.subr.bf16.mxu0 0
    %585 = vmatpush1.bf16.msra.mxu0 0
    %586 = vmatprep.mubr.bf16.mxu0 0
    %587 = vmatmul.mubr.bf16.gmra.mrb[0].mxu0 %v488
    %v588 = vpop.f32.mrb[0].mxu0
    %v589 = vadd.f32 0.0, %v588
    %v590 = vpop.f32.mrb[0].mxu0
    %v591 = vpop.f32.mrb[0].mxu0
    %v592 = vadd.f32 0.0, %v591
    %v593 = vpop.f32.mrb[0].mxu0
    %594 = vdwg.mxu0
    %v595 = vadd.f32 %v589, %v592
    %v596 = vrot.slane %v595, 4
    %v597 = vadd.f32 %v595, %v596
    %v598 = vrot.slane %v597, 2
    %v599 = vadd.f32 %v597, %v598
    %v600 = vrot.slane %v599, 1
    %v601 = vadd.f32 %v599, %v600
    %v602 = vmul.f32 %v589, %v589
    %v603 = vmul.f32 %v592, %v592
    %v604 = vadd.f32 %v602, %v603
    %v605 = vrot.slane %v604, 4
    %v606 = vadd.f32 %v604, %v605
    %v607 = vrot.slane %v606, 2
    %v608 = vadd.f32 %v606, %v607
    %v609 = vrot.slane %v608, 1
    %v610 = vadd.f32 %v608, %v609
    %v611 = vmul.f32 %v610, 16.0
    %v612 = vmul.f32 %v601, %v601
    %v613 = vsub.f32 %v611, %v612
    %v614 = vmax.f32 %v613, 0.0
    %v615 = vadd.f32 %v614, 0.00256
    %v616 = vrsqrt.pop %v615
    %v617 = vld [vmem:[%s2 + $0x3] sm:$0x1]
    %v618 = vmul.f32 %v617, %v616
    %v619 = vmul.f32 %v618, 16.0
    %v620 = vld [vmem:[%s2 + $0xb] sm:$0x1]
    %v621 = vmul.f32 %v601, %v618
    %v622 = vsub.f32 %v620, %v621
    %v623 = vlaneseq
    %v624 = vshrl.u32 %v623, 7
    %v625 = vsub.s32 0, %v624
    %v626 = vrot.slane %v619, %v625
    %v627 = vmul.f32 %v589, %v626
    %v628 = vmul.f32 %v592, %v626
    %v629 = vlaneseq
    %v630 = vshrl.u32 %v629, 7
    %v631 = vsub.s32 0, %v630
    %v632 = vrot.slane %v622, %v631
    %v633 = vadd.f32 %v627, %v632
    %v634 = vadd.f32 %v628, %v632
    %v635 = vmax.f32 %v633, 0.0
    %v636 = vmax.f32 %v634, 0.0
    %v637 = vpack.c.bf16 %v636, %v635
    %s638 = scalar_lea.vmem [#allocation4], 256
    %v639 = vld [vmem:[%s638] sm:$0xf]
    %v640 = vld [vmem:[%s638 + $0x4] sm:$0xf]
    %v641 = vld [vmem:[%s638 + $0x8] sm:$0xf]
    %v642 = vld [vmem:[%s638 + $0xc] sm:$0xf]
    %v643 = vld [vmem:[%s638 + $0x10] sm:$0xf]
    %v644 = vld [vmem:[%s638 + $0x14] sm:$0xf]
    %v645 = vld [vmem:[%s638 + $0x18] sm:$0xf]
    %v646 = vld [vmem:[%s638 + $0x1c] sm:$0xf]
    %v647 = vld [vmem:[%s638 + $0x20] sm:$0xf]
    %v648 = vld [vmem:[%s638 + $0x24] sm:$0xf]
    %v649 = vld [vmem:[%s638 + $0x28] sm:$0xf]
    %v650 = vld [vmem:[%s638 + $0x2c] sm:$0xf]
    %v651 = vld [vmem:[%s638 + $0x30] sm:$0xf]
    %v652 = vld [vmem:[%s638 + $0x34] sm:$0xf]
    %v653 = vld [vmem:[%s638 + $0x38] sm:$0xf]
    %v654 = vld [vmem:[%s638 + $0x3c] sm:$0xf]
    %v671 = vunpack.c.l.b16 %v639
    %v672 = vunpack.c.l.b16 %v640
    %v673 = vunpack.c.l.b16 %v641
    %v674 = vunpack.c.l.b16 %v642
    %v675 = vunpack.c.l.b16 %v643
    %v676 = vunpack.c.l.b16 %v644
    %v677 = vunpack.c.l.b16 %v645
    %v678 = vunpack.c.l.b16 %v646
    %v679 = vunpack.c.l.b16 %v647
    %v680 = vunpack.c.l.b16 %v648
    %v681 = vunpack.c.l.b16 %v649
    %v682 = vunpack.c.l.b16 %v650
    %v683 = vunpack.c.l.b16 %v651
    %v684 = vunpack.c.l.b16 %v652
    %v685 = vunpack.c.l.b16 %v653
    %v686 = vunpack.c.l.b16 %v654
    %v687 = vpack.c.b16 %v672, %v671
    %v688 = vpack.c.b16 %v674, %v673
    %v689 = vpack.c.b16 %v676, %v675
    %v690 = vpack.c.b16 %v678, %v677
    %v691 = vpack.c.b16 %v680, %v679
    %v692 = vpack.c.b16 %v682, %v681
    %v693 = vpack.c.b16 %v684, %v683
    %v694 = vpack.c.b16 %v686, %v685
    %703 = vmatprep.subr.bf16.mxu0 0
    %704 = vmatpush1.bf16.msra.mxu0 %v687
    %705 = vmatprep.subr.bf16.mxu0 0
    %706 = vmatpush1.bf16.msra.mxu0 %v688
    %707 = vmatprep.subr.bf16.mxu0 0
    %708 = vmatpush1.bf16.msra.mxu0 %v689
    %709 = vmatprep.subr.bf16.mxu0 0
    %710 = vmatpush1.bf16.msra.mxu0 %v690
    %711 = vmatprep.subr.bf16.mxu0 0
    %712 = vmatpush1.bf16.msra.mxu0 %v691
    %713 = vmatprep.subr.bf16.mxu0 0
    %714 = vmatpush1.bf16.msra.mxu0 %v692
    %715 = vmatprep.subr.bf16.mxu0 0
    %716 = vmatpush1.bf16.msra.mxu0 %v693
    %717 = vmatprep.subr.bf16.mxu0 0
    %718 = vmatpush1.bf16.msra.mxu0 %v694
    %719 = vmatprep.subr.bf16.mxu0 0
    %720 = vmatpush1.bf16.msra.mxu0 0
    %721 = vmatprep.subr.bf16.mxu0 0
    %722 = vmatpush1.bf16.msra.mxu0 0
    %723 = vmatprep.subr.bf16.mxu0 0
    %724 = vmatpush1.bf16.msra.mxu0 0
    %725 = vmatprep.subr.bf16.mxu0 0
    %726 = vmatpush1.bf16.msra.mxu0 0
    %727 = vmatprep.subr.bf16.mxu0 0
    %728 = vmatpush1.bf16.msra.mxu0 0
    %729 = vmatprep.subr.bf16.mxu0 0
    %730 = vmatpush1.bf16.msra.mxu0 0
    %731 = vmatprep.subr.bf16.mxu0 0
    %732 = vmatpush1.bf16.msra.mxu0 0
    %733 = vmatprep.subr.bf16.mxu0 0
    %734 = vmatpush1.bf16.msra.mxu0 0
    %735 = vmatprep.mubr.bf16.mxu0 0
    %736 = vmatmul.mubr.bf16.gmra.mrb[0].mxu0 %v637
    %v737 = vpop.f32.mrb[0].mxu0
    %v738 = vadd.f32 0.0, %v737
    %v739 = vpop.f32.mrb[0].mxu0
    %v740 = vpop.f32.mrb[0].mxu0
    %v741 = vadd.f32 0.0, %v740
    %v742 = vpop.f32.mrb[0].mxu0
    %743 = vdwg.mxu0
    %v744 = vadd.f32 %v738, %v741
    %v745 = vrot.slane %v744, 4
    %v746 = vadd.f32 %v744, %v745
    %v747 = vrot.slane %v746, 2
    %v748 = vadd.f32 %v746, %v747
    %v749 = vrot.slane %v748, 1
    %v750 = vadd.f32 %v748, %v749
    %v751 = vmul.f32 %v738, %v738
    %v752 = vmul.f32 %v741, %v741
    %v753 = vadd.f32 %v751, %v752
    %v754 = vrot.slane %v753, 4
    %v755 = vadd.f32 %v753, %v754
    %v756 = vrot.slane %v755, 2
    %v757 = vadd.f32 %v755, %v756
    %v758 = vrot.slane %v757, 1
    %v759 = vadd.f32 %v757, %v758
    %v760 = vmul.f32 %v759, 16.0
    %v761 = vmul.f32 %v750, %v750
    %v762 = vsub.f32 %v760, %v761
    %v763 = vmax.f32 %v762, 0.0
    %v764 = vadd.f32 %v763, 0.00256
    %v765 = vrsqrt.pop %v764
    %v766 = vld [vmem:[%s2 + $0x4] sm:$0x1]
    %v767 = vmul.f32 %v766, %v765
    %v768 = vmul.f32 %v767, 16.0
    %v769 = vld [vmem:[%s2 + $0xc] sm:$0x1]
    %v770 = vmul.f32 %v750, %v767
    %v771 = vsub.f32 %v769, %v770
    %v772 = vlaneseq
    %v773 = vshrl.u32 %v772, 7
    %v774 = vsub.s32 0, %v773
    %v775 = vrot.slane %v768, %v774
    %v776 = vmul.f32 %v738, %v775
    %v777 = vmul.f32 %v741, %v775
    %v778 = vlaneseq
    %v779 = vshrl.u32 %v778, 7
    %v780 = vsub.s32 0, %v779
    %v781 = vrot.slane %v771, %v780
    %v782 = vadd.f32 %v776, %v781
    %v783 = vadd.f32 %v777, %v781
    %v784 = vmax.f32 %v782, 0.0
    %v785 = vmax.f32 %v783, 0.0
    %v786 = vpack.c.bf16 %v785, %v784
    %s787 = scalar_lea.vmem [#allocation4], 320
    %v788 = vld [vmem:[%s787] sm:$0xf]
    %v789 = vld [vmem:[%s787 + $0x4] sm:$0xf]
    %v790 = vld [vmem:[%s787 + $0x8] sm:$0xf]
    %v791 = vld [vmem:[%s787 + $0xc] sm:$0xf]
    %v792 = vld [vmem:[%s787 + $0x10] sm:$0xf]
    %v793 = vld [vmem:[%s787 + $0x14] sm:$0xf]
    %v794 = vld [vmem:[%s787 + $0x18] sm:$0xf]
    %v795 = vld [vmem:[%s787 + $0x1c] sm:$0xf]
    %v796 = vld [vmem:[%s787 + $0x20] sm:$0xf]
    %v797 = vld [vmem:[%s787 + $0x24] sm:$0xf]
    %v798 = vld [vmem:[%s787 + $0x28] sm:$0xf]
    %v799 = vld [vmem:[%s787 + $0x2c] sm:$0xf]
    %v800 = vld [vmem:[%s787 + $0x30] sm:$0xf]
    %v801 = vld [vmem:[%s787 + $0x34] sm:$0xf]
    %v802 = vld [vmem:[%s787 + $0x38] sm:$0xf]
    %v803 = vld [vmem:[%s787 + $0x3c] sm:$0xf]
    %v820 = vunpack.c.l.b16 %v788
    %v821 = vunpack.c.l.b16 %v789
    %v822 = vunpack.c.l.b16 %v790
    %v823 = vunpack.c.l.b16 %v791
    %v824 = vunpack.c.l.b16 %v792
    %v825 = vunpack.c.l.b16 %v793
    %v826 = vunpack.c.l.b16 %v794
    %v827 = vunpack.c.l.b16 %v795
    %v828 = vunpack.c.l.b16 %v796
    %v829 = vunpack.c.l.b16 %v797
    %v830 = vunpack.c.l.b16 %v798
    %v831 = vunpack.c.l.b16 %v799
    %v832 = vunpack.c.l.b16 %v800
    %v833 = vunpack.c.l.b16 %v801
    %v834 = vunpack.c.l.b16 %v802
    %v835 = vunpack.c.l.b16 %v803
    %v836 = vpack.c.b16 %v821, %v820
    %v837 = vpack.c.b16 %v823, %v822
    %v838 = vpack.c.b16 %v825, %v824
    %v839 = vpack.c.b16 %v827, %v826
    %v840 = vpack.c.b16 %v829, %v828
    %v841 = vpack.c.b16 %v831, %v830
    %v842 = vpack.c.b16 %v833, %v832
    %v843 = vpack.c.b16 %v835, %v834
    %852 = vmatprep.subr.bf16.mxu0 0
    %853 = vmatpush1.bf16.msra.mxu0 %v836
    %854 = vmatprep.subr.bf16.mxu0 0
    %855 = vmatpush1.bf16.msra.mxu0 %v837
    %856 = vmatprep.subr.bf16.mxu0 0
    %857 = vmatpush1.bf16.msra.mxu0 %v838
    %858 = vmatprep.subr.bf16.mxu0 0
    %859 = vmatpush1.bf16.msra.mxu0 %v839
    %860 = vmatprep.subr.bf16.mxu0 0
    %861 = vmatpush1.bf16.msra.mxu0 %v840
    %862 = vmatprep.subr.bf16.mxu0 0
    %863 = vmatpush1.bf16.msra.mxu0 %v841
    %864 = vmatprep.subr.bf16.mxu0 0
    %865 = vmatpush1.bf16.msra.mxu0 %v842
    %866 = vmatprep.subr.bf16.mxu0 0
    %867 = vmatpush1.bf16.msra.mxu0 %v843
    %868 = vmatprep.subr.bf16.mxu0 0
    %869 = vmatpush1.bf16.msra.mxu0 0
    %870 = vmatprep.subr.bf16.mxu0 0
    %871 = vmatpush1.bf16.msra.mxu0 0
    %872 = vmatprep.subr.bf16.mxu0 0
    %873 = vmatpush1.bf16.msra.mxu0 0
    %874 = vmatprep.subr.bf16.mxu0 0
    %875 = vmatpush1.bf16.msra.mxu0 0
    %876 = vmatprep.subr.bf16.mxu0 0
    %877 = vmatpush1.bf16.msra.mxu0 0
    %878 = vmatprep.subr.bf16.mxu0 0
    %879 = vmatpush1.bf16.msra.mxu0 0
    %880 = vmatprep.subr.bf16.mxu0 0
    %881 = vmatpush1.bf16.msra.mxu0 0
    %882 = vmatprep.subr.bf16.mxu0 0
    %883 = vmatpush1.bf16.msra.mxu0 0
    %884 = vmatprep.mubr.bf16.mxu0 0
    %885 = vmatmul.mubr.bf16.gmra.mrb[0].mxu0 %v786
    %v886 = vpop.f32.mrb[0].mxu0
    %v887 = vadd.f32 0.0, %v886
    %v888 = vpop.f32.mrb[0].mxu0
    %v889 = vpop.f32.mrb[0].mxu0
    %v890 = vadd.f32 0.0, %v889
    %v891 = vpop.f32.mrb[0].mxu0
    %892 = vdwg.mxu0
    %v893 = vadd.f32 %v887, %v890
    %v894 = vrot.slane %v893, 4
    %v895 = vadd.f32 %v893, %v894
    %v896 = vrot.slane %v895, 2
    %v897 = vadd.f32 %v895, %v896
    %v898 = vrot.slane %v897, 1
    %v899 = vadd.f32 %v897, %v898
    %v900 = vmul.f32 %v887, %v887
    %v901 = vmul.f32 %v890, %v890
    %v902 = vadd.f32 %v900, %v901
    %v903 = vrot.slane %v902, 4
    %v904 = vadd.f32 %v902, %v903
    %v905 = vrot.slane %v904, 2
    %v906 = vadd.f32 %v904, %v905
    %v907 = vrot.slane %v906, 1
    %v908 = vadd.f32 %v906, %v907
    %v909 = vmul.f32 %v908, 16.0
    %v910 = vmul.f32 %v899, %v899
    %v911 = vsub.f32 %v909, %v910
    %v912 = vmax.f32 %v911, 0.0
    %v913 = vadd.f32 %v912, 0.00256
    %v914 = vrsqrt.pop %v913
    %v915 = vld [vmem:[%s2 + $0x5] sm:$0x1]
    %v916 = vmul.f32 %v915, %v914
    %v917 = vmul.f32 %v916, 16.0
    %v918 = vld [vmem:[%s2 + $0xd] sm:$0x1]
    %v919 = vmul.f32 %v899, %v916
    %v920 = vsub.f32 %v918, %v919
    %v921 = vlaneseq
    %v922 = vshrl.u32 %v921, 7
    %v923 = vsub.s32 0, %v922
    %v924 = vrot.slane %v917, %v923
    %v925 = vmul.f32 %v887, %v924
    %v926 = vmul.f32 %v890, %v924
    %v927 = vlaneseq
    %v928 = vshrl.u32 %v927, 7
    %v929 = vsub.s32 0, %v928
    %v930 = vrot.slane %v920, %v929
    %v931 = vadd.f32 %v925, %v930
    %v932 = vadd.f32 %v926, %v930
    %v933 = vmax.f32 %v931, 0.0
    %v934 = vmax.f32 %v932, 0.0
    %v935 = vpack.c.bf16 %v934, %v933
    %s936 = scalar_lea.vmem [#allocation4], 384
    %v937 = vld [vmem:[%s936] sm:$0xf]
    %v938 = vld [vmem:[%s936 + $0x4] sm:$0xf]
    %v939 = vld [vmem:[%s936 + $0x8] sm:$0xf]
    %v940 = vld [vmem:[%s936 + $0xc] sm:$0xf]
    %v941 = vld [vmem:[%s936 + $0x10] sm:$0xf]
    %v942 = vld [vmem:[%s936 + $0x14] sm:$0xf]
    %v943 = vld [vmem:[%s936 + $0x18] sm:$0xf]
    %v944 = vld [vmem:[%s936 + $0x1c] sm:$0xf]
    %v945 = vld [vmem:[%s936 + $0x20] sm:$0xf]
    %v946 = vld [vmem:[%s936 + $0x24] sm:$0xf]
    %v947 = vld [vmem:[%s936 + $0x28] sm:$0xf]
    %v948 = vld [vmem:[%s936 + $0x2c] sm:$0xf]
    %v949 = vld [vmem:[%s936 + $0x30] sm:$0xf]
    %v950 = vld [vmem:[%s936 + $0x34] sm:$0xf]
    %v951 = vld [vmem:[%s936 + $0x38] sm:$0xf]
    %v952 = vld [vmem:[%s936 + $0x3c] sm:$0xf]
    %v969 = vunpack.c.l.b16 %v937
    %v970 = vunpack.c.l.b16 %v938
    %v971 = vunpack.c.l.b16 %v939
    %v972 = vunpack.c.l.b16 %v940
    %v973 = vunpack.c.l.b16 %v941
    %v974 = vunpack.c.l.b16 %v942
    %v975 = vunpack.c.l.b16 %v943
    %v976 = vunpack.c.l.b16 %v944
    %v977 = vunpack.c.l.b16 %v945
    %v978 = vunpack.c.l.b16 %v946
    %v979 = vunpack.c.l.b16 %v947
    %v980 = vunpack.c.l.b16 %v948
    %v981 = vunpack.c.l.b16 %v949
    %v982 = vunpack.c.l.b16 %v950
    %v983 = vunpack.c.l.b16 %v951
    %v984 = vunpack.c.l.b16 %v952
    %v985 = vpack.c.b16 %v970, %v969
    %v986 = vpack.c.b16 %v972, %v971
    %v987 = vpack.c.b16 %v974, %v973
    %v988 = vpack.c.b16 %v976, %v975
    %v989 = vpack.c.b16 %v978, %v977
    %v990 = vpack.c.b16 %v980, %v979
    %v991 = vpack.c.b16 %v982, %v981
    %v992 = vpack.c.b16 %v984, %v983
    %1001 = vmatprep.subr.bf16.mxu0 0
    %1002 = vmatpush1.bf16.msra.mxu0 %v985
    %1003 = vmatprep.subr.bf16.mxu0 0
    %1004 = vmatpush1.bf16.msra.mxu0 %v986
    %1005 = vmatprep.subr.bf16.mxu0 0
    %1006 = vmatpush1.bf16.msra.mxu0 %v987
    %1007 = vmatprep.subr.bf16.mxu0 0
    %1008 = vmatpush1.bf16.msra.mxu0 %v988
    %1009 = vmatprep.subr.bf16.mxu0 0
    %1010 = vmatpush1.bf16.msra.mxu0 %v989
    %1011 = vmatprep.subr.bf16.mxu0 0
    %1012 = vmatpush1.bf16.msra.mxu0 %v990
    %1013 = vmatprep.subr.bf16.mxu0 0
    %1014 = vmatpush1.bf16.msra.mxu0 %v991
    %1015 = vmatprep.subr.bf16.mxu0 0
    %1016 = vmatpush1.bf16.msra.mxu0 %v992
    %1017 = vmatprep.subr.bf16.mxu0 0
    %1018 = vmatpush1.bf16.msra.mxu0 0
    %1019 = vmatprep.subr.bf16.mxu0 0
    %1020 = vmatpush1.bf16.msra.mxu0 0
    %1021 = vmatprep.subr.bf16.mxu0 0
    %1022 = vmatpush1.bf16.msra.mxu0 0
    %1023 = vmatprep.subr.bf16.mxu0 0
    %1024 = vmatpush1.bf16.msra.mxu0 0
    %1025 = vmatprep.subr.bf16.mxu0 0
    %1026 = vmatpush1.bf16.msra.mxu0 0
    %1027 = vmatprep.subr.bf16.mxu0 0
    %1028 = vmatpush1.bf16.msra.mxu0 0
    %1029 = vmatprep.subr.bf16.mxu0 0
    %1030 = vmatpush1.bf16.msra.mxu0 0
    %1031 = vmatprep.subr.bf16.mxu0 0
    %1032 = vmatpush1.bf16.msra.mxu0 0
    %1033 = vmatprep.mubr.bf16.mxu0 0
    %1034 = vmatmul.mubr.bf16.gmra.mrb[0].mxu0 %v935
    %v1035 = vpop.f32.mrb[0].mxu0
    %v1036 = vadd.f32 0.0, %v1035
    %v1037 = vpop.f32.mrb[0].mxu0
    %v1038 = vpop.f32.mrb[0].mxu0
    %v1039 = vadd.f32 0.0, %v1038
    %v1040 = vpop.f32.mrb[0].mxu0
    %1041 = vdwg.mxu0
    %v1042 = vadd.f32 %v1036, %v1039
    %v1043 = vrot.slane %v1042, 4
    %v1044 = vadd.f32 %v1042, %v1043
    %v1045 = vrot.slane %v1044, 2
    %v1046 = vadd.f32 %v1044, %v1045
    %v1047 = vrot.slane %v1046, 1
    %v1048 = vadd.f32 %v1046, %v1047
    %v1049 = vmul.f32 %v1036, %v1036
    %v1050 = vmul.f32 %v1039, %v1039
    %v1051 = vadd.f32 %v1049, %v1050
    %v1052 = vrot.slane %v1051, 4
    %v1053 = vadd.f32 %v1051, %v1052
    %v1054 = vrot.slane %v1053, 2
    %v1055 = vadd.f32 %v1053, %v1054
    %v1056 = vrot.slane %v1055, 1
    %v1057 = vadd.f32 %v1055, %v1056
    %v1058 = vmul.f32 %v1057, 16.0
    %v1059 = vmul.f32 %v1048, %v1048
    %v1060 = vsub.f32 %v1058, %v1059
    %v1061 = vmax.f32 %v1060, 0.0
    %v1062 = vadd.f32 %v1061, 0.00256
    %v1063 = vrsqrt.pop %v1062
    %v1064 = vld [vmem:[%s2 + $0x6] sm:$0x1]
    %v1065 = vmul.f32 %v1064, %v1063
    %v1066 = vmul.f32 %v1065, 16.0
    %v1067 = vld [vmem:[%s2 + $0xe] sm:$0x1]
    %v1068 = vmul.f32 %v1048, %v1065
    %v1069 = vsub.f32 %v1067, %v1068
    %v1070 = vlaneseq
    %v1071 = vshrl.u32 %v1070, 7
    %v1072 = vsub.s32 0, %v1071
    %v1073 = vrot.slane %v1066, %v1072
    %v1074 = vmul.f32 %v1036, %v1073
    %v1075 = vmul.f32 %v1039, %v1073
    %v1076 = vlaneseq
    %v1077 = vshrl.u32 %v1076, 7
    %v1078 = vsub.s32 0, %v1077
    %v1079 = vrot.slane %v1069, %v1078
    %v1080 = vadd.f32 %v1074, %v1079
    %v1081 = vadd.f32 %v1075, %v1079
    %v1082 = vmax.f32 %v1080, 0.0
    %v1083 = vmax.f32 %v1081, 0.0
    %v1084 = vpack.c.bf16 %v1083, %v1082
    %s1085 = scalar_lea.vmem [#allocation4], 448
    %v1086 = vld [vmem:[%s1085] sm:$0xf]
    %v1087 = vld [vmem:[%s1085 + $0x4] sm:$0xf]
    %v1088 = vld [vmem:[%s1085 + $0x8] sm:$0xf]
    %v1089 = vld [vmem:[%s1085 + $0xc] sm:$0xf]
    %v1090 = vld [vmem:[%s1085 + $0x10] sm:$0xf]
    %v1091 = vld [vmem:[%s1085 + $0x14] sm:$0xf]
    %v1092 = vld [vmem:[%s1085 + $0x18] sm:$0xf]
    %v1093 = vld [vmem:[%s1085 + $0x1c] sm:$0xf]
    %v1094 = vld [vmem:[%s1085 + $0x20] sm:$0xf]
    %v1095 = vld [vmem:[%s1085 + $0x24] sm:$0xf]
    %v1096 = vld [vmem:[%s1085 + $0x28] sm:$0xf]
    %v1097 = vld [vmem:[%s1085 + $0x2c] sm:$0xf]
    %v1098 = vld [vmem:[%s1085 + $0x30] sm:$0xf]
    %v1099 = vld [vmem:[%s1085 + $0x34] sm:$0xf]
    %v1100 = vld [vmem:[%s1085 + $0x38] sm:$0xf]
    %v1101 = vld [vmem:[%s1085 + $0x3c] sm:$0xf]
    %v1118 = vunpack.c.l.b16 %v1086
    %v1119 = vunpack.c.l.b16 %v1087
    %v1120 = vunpack.c.l.b16 %v1088
    %v1121 = vunpack.c.l.b16 %v1089
    %v1122 = vunpack.c.l.b16 %v1090
    %v1123 = vunpack.c.l.b16 %v1091
    %v1124 = vunpack.c.l.b16 %v1092
    %v1125 = vunpack.c.l.b16 %v1093
    %v1126 = vunpack.c.l.b16 %v1094
    %v1127 = vunpack.c.l.b16 %v1095
    %v1128 = vunpack.c.l.b16 %v1096
    %v1129 = vunpack.c.l.b16 %v1097
    %v1130 = vunpack.c.l.b16 %v1098
    %v1131 = vunpack.c.l.b16 %v1099
    %v1132 = vunpack.c.l.b16 %v1100
    %v1133 = vunpack.c.l.b16 %v1101
    %v1134 = vpack.c.b16 %v1119, %v1118
    %v1135 = vpack.c.b16 %v1121, %v1120
    %v1136 = vpack.c.b16 %v1123, %v1122
    %v1137 = vpack.c.b16 %v1125, %v1124
    %v1138 = vpack.c.b16 %v1127, %v1126
    %v1139 = vpack.c.b16 %v1129, %v1128
    %v1140 = vpack.c.b16 %v1131, %v1130
    %v1141 = vpack.c.b16 %v1133, %v1132
    %1150 = vmatprep.subr.bf16.mxu0 0
    %1151 = vmatpush1.bf16.msra.mxu0 %v1134
    %1152 = vmatprep.subr.bf16.mxu0 0
    %1153 = vmatpush1.bf16.msra.mxu0 %v1135
    %1154 = vmatprep.subr.bf16.mxu0 0
    %1155 = vmatpush1.bf16.msra.mxu0 %v1136
    %1156 = vmatprep.subr.bf16.mxu0 0
    %1157 = vmatpush1.bf16.msra.mxu0 %v1137
    %1158 = vmatprep.subr.bf16.mxu0 0
    %1159 = vmatpush1.bf16.msra.mxu0 %v1138
    %1160 = vmatprep.subr.bf16.mxu0 0
    %1161 = vmatpush1.bf16.msra.mxu0 %v1139
    %1162 = vmatprep.subr.bf16.mxu0 0
    %1163 = vmatpush1.bf16.msra.mxu0 %v1140
    %1164 = vmatprep.subr.bf16.mxu0 0
    %1165 = vmatpush1.bf16.msra.mxu0 %v1141
    %1166 = vmatprep.subr.bf16.mxu0 0
    %1167 = vmatpush1.bf16.msra.mxu0 0
    %1168 = vmatprep.subr.bf16.mxu0 0
    %1169 = vmatpush1.bf16.msra.mxu0 0
    %1170 = vmatprep.subr.bf16.mxu0 0
    %1171 = vmatpush1.bf16.msra.mxu0 0
    %1172 = vmatprep.subr.bf16.mxu0 0
    %1173 = vmatpush1.bf16.msra.mxu0 0
    %1174 = vmatprep.subr.bf16.mxu0 0
    %1175 = vmatpush1.bf16.msra.mxu0 0
    %1176 = vmatprep.subr.bf16.mxu0 0
    %1177 = vmatpush1.bf16.msra.mxu0 0
    %1178 = vmatprep.subr.bf16.mxu0 0
    %1179 = vmatpush1.bf16.msra.mxu0 0
    %1180 = vmatprep.subr.bf16.mxu0 0
    %1181 = vmatpush1.bf16.msra.mxu0 0
    %1182 = vmatprep.mubr.bf16.mxu0 0
    %1183 = vmatmul.mubr.bf16.gmra.mrb[0].mxu0 %v1084
    %v1184 = vpop.f32.mrb[0].mxu0
    %v1185 = vadd.f32 0.0, %v1184
    %v1186 = vpop.f32.mrb[0].mxu0
    %v1187 = vpop.f32.mrb[0].mxu0
    %v1188 = vadd.f32 0.0, %v1187
    %v1189 = vpop.f32.mrb[0].mxu0
    %1190 = vdwg.mxu0
    %s1191 = sld [smem:[#allocation3]]
    %v1192 = vstv %s1191
    %v1193 = vadd.f32 %v1185, %v1192
    %v1194 = vadd.f32 %v1188, %v1192
    %vm1195 = vcmask 7168
    %1196 = vst.msk [vmem:[%s4] sm:$0xff] %vm1195, %v1193
    %1197 = vst.msk [vmem:[%s4 + $0x8] sm:$0xff] %vm1195, %v1194
    // Predicated region
    $region22: #{regression_model_latency.1} parent=1 // pred_check
      _
    $region23: #{regression_model_latency.1} parent=1 // pred_check_branch
      %1199 = sbr.rel (0) target = $region25
    $region24: #{regression_model_latency.1} parent=1 // pred_region
      _
    $region25: #{regression_model_latency.1} parent=1 // pred_fallthru
      _
    // Predicated region
    $region26: #{regression_model_latency.1} parent=1 // pred_check
      _
    $region27: #{regression_model_latency.1} parent=1 // pred_check_branch
      %1201 = sbr.rel (0) target = $region29
    $region28: #{regression_model_latency.1} parent=1 // pred_region
      _
    $region29: #{regression_model_latency.1} parent=1 // pred_fallthru
      _
    %1202 = vsyncpa [#allocation5], 1

</llo_original>
